<compile_context>
chip_gen: v6e
topology: v6e:2x2x1
jax: 0.10.0
libtpu: 0.0.40
codegen_flags: <defaults>
</compile_context>

<pallas_src>
import functools

import jax
import jax.numpy as jnp
from jax.experimental import pallas as pl
from jax.experimental.pallas import tpu as pltpu

_MiB = 1024 * 1024


def _ffn_kernel_inplace(x_ref, w1_ref, b1_ref, w2_ref, b2_ref, o_ref):
    """f32-output variant: accumulate directly into the VMEM-resident output
    tile (its block index is constant across the ff reduction axis)."""
    j = pl.program_id(1)

    @pl.when(j == 0)
    def _():
        o_ref[...] = jnp.zeros_like(o_ref)

    # h_tile = relu(x @ W1[:, ff_tile] + b1[ff_tile])      (bm, bf)
    h = jnp.dot(x_ref[...], w1_ref[...], preferred_element_type=jnp.float32)
    h = jnp.maximum(h + b1_ref[...], 0.0)                  # ReLU on VPU

    # out_tile += h_tile @ W2[ff_tile, :]
    o_ref[...] += jnp.dot(h.astype(w2_ref.dtype), w2_ref[...],
                          preferred_element_type=jnp.float32)

    @pl.when(j == pl.num_programs(1) - 1)
    def _():
        o_ref[...] += b2_ref[...]


def _ffn_kernel_acc(x_ref, w1_ref, b1_ref, w2_ref, b2_ref, o_ref, acc_ref):
    """Low-precision-output variant: f32 VMEM accumulator, cast once at the
    last ff step."""
    j = pl.program_id(1)

    @pl.when(j == 0)
    def _():
        acc_ref[...] = jnp.zeros_like(acc_ref)

    h = jnp.dot(x_ref[...], w1_ref[...], preferred_element_type=jnp.float32)
    h = jnp.maximum(h + b1_ref[...], 0.0)
    acc_ref[...] += jnp.dot(h.astype(w2_ref.dtype), w2_ref[...],
                            preferred_element_type=jnp.float32)

    @pl.when(j == pl.num_programs(1) - 1)
    def _():
        o_ref[...] = (acc_ref[...] + b2_ref[...]).astype(o_ref.dtype)


def _round_up(x, n):
    return ((x + n - 1) // n) * n


def _tpu_generation():
    """Returns (default_block_m, vmem_capacity_bytes, vmem_headroom_frac,
    num_tensorcores) for the current TPU generation.  Trace-time only."""
    vmem_cap = 128 * _MiB
    try:
        vmem_cap = int(pltpu.get_tpu_info().vmem_capacity_bytes)
    except Exception:
        pass
    kind = ""
    try:
        kind = jax.devices()[0].device_kind.lower()
    except Exception:
        pass
    if "v7" in kind or vmem_cap <= 64 * _MiB:
        # v7x: 64 MiB VMEM/TC, 2 TCs; ~996 TF/s vs ~3.2 TB/s -> bm=512 is
        # compute-bound with footprint well under 64 MiB.  Cap limit ~80%.
        return 512, min(vmem_cap, 64 * _MiB), 0.80, 2
    if "v6" in kind:
        # v6e: ~918 TF/s vs ~1.4 TB/s -> need bm~768-1024 to be MXU-bound.
        return 1024, vmem_cap, 0.85, 1
    # v5e (or unknown 128 MiB part): already near the roofline knee at bm=256.
    return 256, vmem_cap, 0.85, 1


def _pick_block_ff(d_ff, block_ff):
    """Returns (bf, padded d_ff).  bf is 128-aligned (or the full d_ff) so the
    W1 column-slab DMA stays contiguous per row; d_ff is padded up to a tile
    multiple so the streaming reduction works for any d_ff."""
    if d_ff <= block_ff:
        return d_ff, d_ff
    bf = max(128, block_ff - (block_ff % 128))
    return bf, _round_up(d_ff, bf)


@functools.partial(jax.jit, static_argnames=("block_m", "block_ff"))
def feed_forward_network(x, w1, b1, w2, b2, *, block_m=None, block_ff=512):
    """y = relu(x @ W1 + b1) @ W2 + b2.  x: (..., d_model); same shape/dtype out.

    Weights are stored pre-transposed relative to torch.nn.Linear:
      w1: (d_model, d_ff), w2: (d_ff, d_model); b1: (1, d_ff), b2: (1, d_model).
    """
    d_model = x.shape[-1]
    d_ff = w1.shape[-1]
    orig_shape = x.shape

    x2d = x.reshape(-1, d_model)
    m = x2d.shape[0]

    default_bm, vmem_cap, vmem_frac, num_tc = _tpu_generation()
    bm_req = default_bm if block_m is None else block_m

    # Row tile: multiple of 8 (sublane), no larger than the (rounded) row count.
    bm = min(bm_req, _round_up(m, 8))
    # v7x megacore: ensure the "parallel" row axis has >=2 tiles when m allows,
    # otherwise one TensorCore sits idle.
    if num_tc > 1 and m > 128 and m < 2 * bm:
        bm = min(bm, max(128, _round_up(pl.cdiv(m, 2), 8)))

    bf, d_ff_pad = _pick_block_ff(d_ff, block_ff)
    if d_ff_pad != d_ff:
        # Zero-pad the hidden dim once so every ff tile is full width.  Exact:
        # relu(x @ 0 + 0) = 0 and zero rows of W2 contribute nothing.
        pad = d_ff_pad - d_ff
        w1 = jnp.pad(w1, ((0, 0), (0, pad)))
        b1 = jnp.pad(b1, ((0, 0), (0, pad)))
        w2 = jnp.pad(w2, ((0, pad), (0, 0)))

    grid = (pl.cdiv(m, bm), d_ff_pad // bf)
    row_tiles = grid[0]

    out_dtype = x.dtype
    use_acc_scratch = out_dtype != jnp.float32

    x_isz = x2d.dtype.itemsize
    w_isz = jnp.dtype(w1.dtype).itemsize
    o_isz = jnp.dtype(out_dtype).itemsize

    # Double-buffered in/weight/out tiles (+ f32 accumulator only for
    # low-precision outputs).
    vmem_needed = (
        2 * bm * d_model * x_isz                      # x tile
        + 2 * d_model * bf * w_isz                    # W1 tile
        + 2 * bf * d_model * w_isz                    # W2 tile
        + 2 * 8 * max(bf, 128) * w_isz                # b1 (sublane/lane padded)
        + 2 * 8 * max(d_model, 128) * w_isz           # b2
        + 2 * bm * d_model * o_isz                    # out tile
        + (bm * d_model * 4 if use_acc_scratch else 0)
    )
    # Generation-aware cap with headroom (no flat 64 MiB cap on 128 MiB parts;
    # never the full physical VMEM on v7x).
    vmem_limit = int(min(max(int(vmem_needed * 1.25), 32 * _MiB),
                         int(vmem_cap * vmem_frac)))

    cost = pl.CostEstimate(
        flops=4 * m * d_model * d_ff,                 # two matmuls, 2*M*K*N each
        transcendentals=0,
        bytes_accessed=(
            m * d_model * (x_isz + o_isz)             # read x, write out
            # Weights/biases are re-streamed once per row tile.
            + row_tiles * (w1.size + b1.size + w2.size) * w_isz
            + row_tiles * b2.size * jnp.dtype(b2.dtype).itemsize),
    )

    kernel = _ffn_kernel_acc if use_acc_scratch else _ffn_kernel_inplace
    scratch = ([pltpu.VMEM((bm, d_model), jnp.float32)]
               if use_acc_scratch else [])

    # NOTE: keep d_model a multiple of 128 for real configs so the output slab
    # stays lane-dense (avoids masked vst.msk partial stores).
    # TODO(synk): on 128 MiB parts, pipeline_mode=pl.Buffered(3) on the W1/W2
    # specs can hide the first-step weight fetch per row tile if xprof shows
    # exposed DMA (do not do this on v7x at the large-bm config).
    out = pl.pallas_call(
        kernel,
        out_shape=jax.ShapeDtypeStruct((m, d_model), out_dtype),
        grid_spec=pltpu.PrefetchScalarGridSpec(
            num_scalar_prefetch=0,
            grid=grid,
            in_specs=[
                pl.BlockSpec((bm, d_model), lambda i, j: (i, 0)),   # x row tile
                pl.BlockSpec((d_model, bf), lambda i, j: (0, j)),   # W1 ff tile
                pl.BlockSpec((1, bf), lambda i, j: (0, j)),         # b1 ff tile
                pl.BlockSpec((bf, d_model), lambda i, j: (j, 0)),   # W2 ff tile
                pl.BlockSpec((1, d_model), lambda i, j: (0, 0)),    # b2
            ],
            out_specs=pl.BlockSpec((bm, d_model), lambda i, j: (i, 0)),
            scratch_shapes=scratch,
        ),
        compiler_params=pltpu.CompilerParams(
            dimension_semantics=("parallel", "arbitrary"),
            vmem_limit_bytes=vmem_limit,
        ),
        cost_estimate=cost,
    )(x2d, w1, b1, w2, b2)

    return out.reshape(orig_shape)


def init_ffn_params(key, d_model, d_ff, dtype=jnp.float32):
    """PyTorch nn.Linear-style init (U[-1/sqrt(fan_in), 1/sqrt(fan_in)]).
    Weights stored pre-transposed as (in, out) for x @ W."""
    k1, k2, k3, k4 = jax.random.split(key, 4)
    bound1 = 1.0 / (d_model ** 0.5)
    bound2 = 1.0 / (d_ff ** 0.5)
    w1 = jax.random.uniform(k1, (d_model, d_ff), jnp.float32, -bound1, bound1)
    b1 = jax.random.uniform(k2, (1, d_ff), jnp.float32, -bound1, bound1)
    w2 = jax.random.uniform(k3, (d_ff, d_model), jnp.float32, -bound2, bound2)
    b2 = jax.random.uniform(k4, (1, d_model), jnp.float32, -bound2, bound2)
    return tuple(p.astype(dtype) for p in (w1, b1, w2, b2))


if __name__ == "__main__":
    key = jax.random.PRNGKey(0)
    k_x, k_p, k_x2, k_p2, k_x3, k_p3 = jax.random.split(key, 6)

    # --- Config 1: small shapes implied by the module ------------------------
    batch, seq, d_model, d_ff = 2, 8, 32, 64
    x = jax.random.normal(k_x, (batch, seq, d_model), jnp.float32)
    w1, b1, w2, b2 = init_ffn_params(k_p, d_model, d_ff)
    out = jax.block_until_ready(feed_forward_network(x, w1, b1, w2, b2))
    ref = jnp.maximum(x @ w1 + b1[0], 0.0) @ w2 + b2[0]
    assert out.shape == x.shape and out.dtype == x.dtype
    assert jnp.allclose(out, ref, atol=1e-4, rtol=1e-5), "config1 mismatch"

    # --- Config 2: ragged rows + d_ff padding + reduction tiling -------------
    batch2, seq2, d_model2, d_ff2 = 3, 7, 128, 320   # m = 21, d_ff pads to 384
    x2 = jax.random.normal(k_x2, (batch2, seq2, d_model2), jnp.float32)
    p2 = init_ffn_params(k_p2, d_model2, d_ff2)
    out2 = jax.block_until_ready(
        feed_forward_network(x2, *p2, block_m=16, block_ff=128))
    ref2 = jnp.maximum(x2 @ p2[0] + p2[1][0], 0.0) @ p2[2] + p2[3][0]
    assert out2.shape == x2.shape and out2.dtype == x2.dtype
    assert jnp.allclose(out2, ref2, atol=1e-4, rtol=1e-4), "config2 mismatch"

    # --- Config 3: bf16 path (f32 accumulator scratch, cast on final step) ---
    batch3, seq3, d_model3, d_ff3 = 2, 16, 128, 512
    x3 = jax.random.normal(k_x3, (batch3, seq3, d_model3), jnp.float32
                           ).astype(jnp.bfloat16)
    p3 = init_ffn_params(k_p3, d_model3, d_ff3, dtype=jnp.bfloat16)
    out3 = jax.block_until_ready(feed_forward_network(x3, *p3))
    x3f, w1f, b1f, w2f, b2f = (a.astype(jnp.float32) for a in (x3, *p3))
    ref3 = jnp.maximum(x3f @ w1f + b1f[0], 0.0) @ w2f + b2f[0]
    assert out3.shape == x3.shape and out3.dtype == jnp.bfloat16
    assert jnp.allclose(out3.astype(jnp.float32), ref3,
                        atol=5e-2, rtol=5e-2), "config3 mismatch"

    print("KERNEL_OK")
</pallas_src>

<mosaic_0001>
module attributes {stable_mosaic.version = 11 : i64} {
  func.func @_ffn_kernel_inplace(%arg0: i32, %arg1: i32, %arg2: memref<16x32xf32, #tpu.memory_space<vmem>>, %arg3: memref<32x64xf32, #tpu.memory_space<vmem>>, %arg4: memref<1x64xf32, #tpu.memory_space<vmem>>, %arg5: memref<64x32xf32, #tpu.memory_space<vmem>>, %arg6: memref<1x32xf32, #tpu.memory_space<vmem>>, %arg7: memref<16x32xf32, #tpu.memory_space<vmem>>) attributes {dimension_semantics = [#tpu.dimension_semantics<parallel>, #tpu.dimension_semantics<arbitrary>], iteration_bounds = array<i64: 1, 1>, scalar_prefetch = 0 : i64, scratch_operands = 0 : i64, tpu.core_type = #tpu.core_type<tc>, window_params = [{transform_indices = @transform_0, window_bounds = array<i64: 16, 32>}, {transform_indices = @transform_1, window_bounds = array<i64: 32, 64>}, {transform_indices = @transform_2, window_bounds = array<i64: 1, 64>}, {transform_indices = @transform_3, window_bounds = array<i64: 64, 32>}, {pipeline_mode = #tpu.pipeline_mode<synchronous>, transform_indices = @transform_4, window_bounds = array<i64: 1, 32>}, {transform_indices = @transform_5, window_bounds = array<i64: 16, 32>}]} {
    %c0_i32 = arith.constant 0 : i32
    %0 = arith.cmpi eq, %arg1, %c0_i32 : i32
    %1 = arith.extui %0 : i1 to i32
    %c0_i32_0 = arith.constant 0 : i32
    %2 = arith.cmpi ne, %1, %c0_i32_0 : i32
    scf.if %2 {
      %cst_16 = arith.constant 0.000000e+00 : f32
      %19 = vector.broadcast %cst_16 : f32 to vector<16x32xf32>
      %c0_17 = arith.constant 0 : index
      %c0_18 = arith.constant 0 : index
      %20 = vector.load %arg7[%c0_17, %c0_18] : memref<16x32xf32, #tpu.memory_space<vmem>>, vector<16x32xf32>
      tpu.vector_store %arg7[%c0_17, %c0_18], %19 {strides = array<i32>} : memref<16x32xf32, #tpu.memory_space<vmem>>, vector<16x32xf32>,
    } else {
    }
    %c0 = arith.constant 0 : index
    %c0_1 = arith.constant 0 : index
    %3 = vector.load %arg2[%c0, %c0_1] : memref<16x32xf32, #tpu.memory_space<vmem>>, vector<16x32xf32>
    %c0_2 = arith.constant 0 : index
    %c0_3 = arith.constant 0 : index
    %4 = vector.load %arg3[%c0_2, %c0_3] : memref<32x64xf32, #tpu.memory_space<vmem>>, vector<32x64xf32>
    %cst = arith.constant dense<0.000000e+00> : vector<16x64xf32>
    %5 = tpu.matmul %3, %4, %cst {dimension_numbers = #tpu.dot_dimension_numbers<[1], [0], [0], [1], [0, 0, 1, 1], [], []>} : vector<16x32xf32>, vector<32x64xf32>, vector<16x64xf32> -> vector<16x64xf32>
    %c0_4 = arith.constant 0 : index
    %c0_5 = arith.constant 0 : index
    %6 = vector.load %arg4[%c0_4, %c0_5] : memref<1x64xf32, #tpu.memory_space<vmem>>, vector<1x64xf32>
    %7 = vector.broadcast %6 : vector<1x64xf32> to vector<16x64xf32>
    %8 = arith.addf %5, %7 : vector<16x64xf32>
    %cst_6 = arith.constant 0.000000e+00 : f32
    %9 = vector.broadcast %cst_6 : f32 to vector<16x64xf32>
    %10 = arith.maximumf %8, %9 : vector<16x64xf32>
    %c0_7 = arith.constant 0 : index
    %c0_8 = arith.constant 0 : index
    %11 = vector.load %arg7[%c0_7, %c0_8] : memref<16x32xf32, #tpu.memory_space<vmem>>, vector<16x32xf32>
    %c0_9 = arith.constant 0 : index
    %c0_10 = arith.constant 0 : index
    %12 = vector.load %arg5[%c0_9, %c0_10] : memref<64x32xf32, #tpu.memory_space<vmem>>, vector<64x32xf32>
    %cst_11 = arith.constant dense<0.000000e+00> : vector<16x32xf32>
    %13 = tpu.matmul %10, %12, %cst_11 {dimension_numbers = #tpu.dot_dimension_numbers<[1], [0], [0], [1], [0, 0, 1, 1], [], []>} : vector<16x64xf32>, vector<64x32xf32>, vector<16x32xf32> -> vector<16x32xf32>
    %14 = arith.addf %11, %13 : vector<16x32xf32>
    %c0_12 = arith.constant 0 : index
    %c0_13 = arith.constant 0 : index
    %15 = vector.load %arg7[%c0_12, %c0_13] : memref<16x32xf32, #tpu.memory_space<vmem>>, vector<16x32xf32>
    tpu.vector_store %arg7[%c0_12, %c0_13], %14 {strides = array<i32>} : memref<16x32xf32, #tpu.memory_space<vmem>>, vector<16x32xf32>,
    %c0_i32_14 = arith.constant 0 : i32
    %16 = arith.cmpi eq, %arg1, %c0_i32_14 : i32
    %17 = arith.extui %16 : i1 to i32
    %c0_i32_15 = arith.constant 0 : i32
    %18 = arith.cmpi ne, %17, %c0_i32_15 : i32
    scf.if %18 {
      %c0_16 = arith.constant 0 : index
      %c0_17 = arith.constant 0 : index
      %19 = vector.load %arg7[%c0_16, %c0_17] : memref<16x32xf32, #tpu.memory_space<vmem>>, vector<16x32xf32>
      %c0_18 = arith.constant 0 : index
      %c0_19 = arith.constant 0 : index
      %20 = vector.load %arg6[%c0_18, %c0_19] : memref<1x32xf32, #tpu.memory_space<vmem>>, vector<1x32xf32>
      %21 = vector.broadcast %20 : vector<1x32xf32> to vector<16x32xf32>
      %22 = arith.addf %19, %21 : vector<16x32xf32>
      %c0_20 = arith.constant 0 : index
      %c0_21 = arith.constant 0 : index
      %23 = vector.load %arg7[%c0_20, %c0_21] : memref<16x32xf32, #tpu.memory_space<vmem>>, vector<16x32xf32>
      tpu.vector_store %arg7[%c0_20, %c0_21], %22 {strides = array<i32>} : memref<16x32xf32, #tpu.memory_space<vmem>>, vector<16x32xf32>,
    } else {
    }
    return
  }
  func.func @transform_0(%arg0: i32, %arg1: i32) -> (i32, i32) {
    %c0_i32 = arith.constant 0 : i32
    %c0_i32_0 = arith.constant 0 : i32
    return %arg0, %c0_i32 : i32, i32
  }
  func.func @transform_1(%arg0: i32, %arg1: i32) -> (i32, i32) {
    %c0_i32 = arith.constant 0 : i32
    %c0_i32_0 = arith.constant 0 : i32
    return %c0_i32, %arg1 : i32, i32
  }
  func.func @transform_2(%arg0: i32, %arg1: i32) -> (i32, i32) {
    %c0_i32 = arith.constant 0 : i32
    %c0_i32_0 = arith.constant 0 : i32
    return %c0_i32, %arg1 : i32, i32
  }
  func.func @transform_3(%arg0: i32, %arg1: i32) -> (i32, i32) {
    %c0_i32 = arith.constant 0 : i32
    %c0_i32_0 = arith.constant 0 : i32
    return %arg1, %c0_i32 : i32, i32
  }
  func.func @transform_4(%arg0: i32, %arg1: i32) -> (i32, i32) {
    %c0_i32 = arith.constant 0 : i32
    %c0_i32_0 = arith.constant 0 : i32
    %c0_i32_1 = arith.constant 0 : i32
    return %c0_i32, %c0_i32_0 : i32, i32
  }
  func.func @transform_5(%arg0: i32, %arg1: i32) -> (i32, i32) {
    %c0_i32 = arith.constant 0 : i32
    %c0_i32_0 = arith.constant 0 : i32
    return %arg0, %c0_i32 : i32, i32
  }
}

</mosaic_0001>

<llo_original>
// kernel: feed_forward_network.1
$region0: #{feed_forward_network.1}
  #allocation0 [shape = 'u32[]', space=smem, size = 0x4, offset = 0x4, fixed_abs, tag = 'smem constant byte address 0x4 - core index']
  #allocation1 [shape = 'u32[144,128]{1,0:T(1,128)}', space=vmem, size = 0x12000, scoped, tag = 'internal scratch']
  %s0 = inlined_call_operand.vmem [shape: f32[16,32], index: 0, kind: input, shape index: {}]
  %s1 = inlined_call_operand.vmem [shape: f32[32,64], index: 1, kind: input, shape index: {}]
  %s2 = inlined_call_operand.vmem [shape: f32[1,64], index: 2, kind: input, shape index: {}]
  %s3 = inlined_call_operand.vmem [shape: f32[64,32], index: 3, kind: input, shape index: {}]
  %s4 = inlined_call_operand.vmem [shape: f32[1,32], index: 4, kind: input, shape index: {}]
  %s5 = inlined_call_operand.hbm [shape: f32[16,32], index: 5, kind: output, shape index: {}]
  %s6 = sld [smem:[#allocation0]]
  $region38: #{feed_forward_network.1} parent=0
    _
  %s8 = ssub.s32 1, %s6
  %s9 = scalar_select 0, %s8, %s6
  $region1: #{feed_forward_network.1} parent=0
    #allocation2 [shape = 'u8[8192]{0}', space=vmem, size = 0x2000, scoped, tag = 'output window, operand 0, single buffered']
    #allocation3 [shape = 's32[1]{0}', space=sflag, size = 0x4, scoped, tag = 'scoped memory for feed_forward_network.1']
    %10 = vsyncpa [#allocation3], 0
    // Predicated region
    $region2: #{feed_forward_network.1} parent=1 // pred_check
      _
    $region3: #{feed_forward_network.1} parent=1 // pred_check_branch
      %12 = sbr.rel (0) target = $region5
    $region4: #{feed_forward_network.1} parent=1 // pred_region
      _
    $region5: #{feed_forward_network.1} parent=1 // pred_fallthru
      _
    // Predicated region
    $region6: #{feed_forward_network.1} parent=1 // pred_check
      _
    $region7: #{feed_forward_network.1} parent=1 // pred_check_branch
      %14 = sbr.rel (0) target = $region9
    $region8: #{feed_forward_network.1} parent=1 // pred_region
      _
    $region9: #{feed_forward_network.1} parent=1 // pred_fallthru
      _
    // Predicated region
    $region10: #{feed_forward_network.1} parent=1 // pred_check
      _
    $region11: #{feed_forward_network.1} parent=1 // pred_check_branch
      %16 = sbr.rel (0) target = $region13
    $region12: #{feed_forward_network.1} parent=1 // pred_region
      _
    $region13: #{feed_forward_network.1} parent=1 // pred_fallthru
      _
    // Predicated region
    $region14: #{feed_forward_network.1} parent=1 // pred_check
      _
    $region15: #{feed_forward_network.1} parent=1 // pred_check_branch
      %18 = sbr.rel (0) target = $region17
    $region16: #{feed_forward_network.1} parent=1 // pred_region
      _
    $region17: #{feed_forward_network.1} parent=1 // pred_fallthru
      _
    // Predicated region
    $region18: #{feed_forward_network.1} parent=1 // pred_check
      _
    $region19: #{feed_forward_network.1} parent=1 // pred_check_branch
      %20 = sbr.rel (0) target = $region21
    $region20: #{feed_forward_network.1} parent=1 // pred_region
      _
    $region21: #{feed_forward_network.1} parent=1 // pred_fallthru
      _
    %p21 = scmp.eq.s32.totalorder 0, 0
    // Predicated region
    $region22: #{feed_forward_network.1} parent=1 // pred_check
      %p22 = pneg %p21
    $region23: #{feed_forward_network.1} parent=1 // pred_check_branch
      %24 = sbr.rel (%p22) target = $region25
    $region24: #{feed_forward_network.1} parent=1 // pred_region
      %vm25 = vcmask 261120
      %26 = vst.msk [vmem:[#allocation2] sm:$0xff] %vm25, 0.0
      %27 = vst.msk [vmem:[#allocation2 + $0x8] sm:$0xff] %vm25, 0.0
    $region25: #{feed_forward_network.1} parent=1 // pred_fallthru
      _
    %v28 = vld [vmem:[%s0] sm:$0xff]
    %v29 = vld [vmem:[%s0 + $0x8] sm:$0xff]
    %v30 = vld [vmem:[%s1] sm:$0xff]
    %v31 = vld [vmem:[%s1 + $0x8] sm:$0xff]
    %v32 = vld [vmem:[%s1 + $0x10] sm:$0xff]
    %v33 = vld [vmem:[%s1 + $0x18] sm:$0xff]
    %v34 = vld [vmem:[%s2] sm:$0x1]
    %v36 = vlaneseq
    %v37 = vshrl.u32 %v36, 7
    %v38 = vsub.s32 0, %v37
    %v39 = vrot.slane %v34, %v38
    %vm41 = vcmask 261120
    %v43 = vsel %vm41, %v28, 0
    %v46 = vsel %vm41, %v29, 0
    %48 = vmatprep.subr.mxu0 0.0
    %49 = vmatpush1.msra.mxu0 0.0
    %50 = vmatprep.subr.mxu0 0.0
    %51 = vmatpush1.msra.mxu0 0.0
    %52 = vmatprep.subr.mxu0 0.0
    %53 = vmatpush1.msra.mxu0 0.0
    %54 = vmatprep.subr.mxu0 0.0
    %55 = vmatpush1.msra.mxu0 0.0
    %56 = vmatprep.subr.mxu0 0.0
    %57 = vmatpush1.msra.mxu0 0.0
    %58 = vmatprep.subr.mxu0 0.0
    %59 = vmatpush1.msra.mxu0 0.0
    %60 = vmatprep.subr.mxu0 0.0
    %61 = vmatpush1.msra.mxu0 0.0
    %62 = vmatprep.subr.mxu0 0.0
    %63 = vmatpush1.msra.mxu0 0.0
    %64 = vmatprep.subr.mxu0 0.0
    %65 = vmatpush1.msra.mxu0 0.0
    %66 = vmatprep.subr.mxu0 0.0
    %67 = vmatpush1.msra.mxu0 0.0
    %68 = vmatprep.subr.mxu0 0.0
    %69 = vmatpush1.msra.mxu0 0.0
    %70 = vmatprep.subr.mxu0 0.0
    %71 = vmatpush1.msra.mxu0 0.0
    %72 = vmatprep.subr.mxu0 0.0
    %73 = vmatpush1.msra.mxu0 %v33
    %74 = vmatprep.subr.mxu0 0.0
    %75 = vmatpush1.msra.mxu0 %v32
    %76 = vmatprep.subr.mxu0 0.0
    %77 = vmatpush1.msra.mxu0 %v31
    %78 = vmatprep.subr.mxu0 0.0
    %79 = vmatpush1.msra.mxu0 %v30
    %80 = vmatprep.subr.mxu0 0.0
    %81 = vmatpush2.msra.mxu0 0.0
    %82 = vmatprep.subr.mxu0 0.0
    %83 = vmatpush2.msra.mxu0 0.0
    %84 = vmatprep.subr.mxu0 0.0
    %85 = vmatpush2.msra.mxu0 0.0
    %86 = vmatprep.subr.mxu0 0.0
    %87 = vmatpush2.msra.mxu0 0.0
    %88 = vmatprep.subr.mxu0 0.0
    %89 = vmatpush2.msra.mxu0 0.0
    %90 = vmatprep.subr.mxu0 0.0
    %91 = vmatpush2.msra.mxu0 0.0
    %92 = vmatprep.subr.mxu0 0.0
    %93 = vmatpush2.msra.mxu0 0.0
    %94 = vmatprep.subr.mxu0 0.0
    %95 = vmatpush2.msra.mxu0 0.0
    %96 = vmatprep.subr.mxu0 0.0
    %97 = vmatpush2.msra.mxu0 0.0
    %98 = vmatprep.subr.mxu0 0.0
    %99 = vmatpush2.msra.mxu0 0.0
    %100 = vmatprep.subr.mxu0 0.0
    %101 = vmatpush2.msra.mxu0 0.0
    %102 = vmatprep.subr.mxu0 0.0
    %103 = vmatpush2.msra.mxu0 0.0
    %104 = vmatprep.subr.mxu0 0.0
    %105 = vmatpush2.msra.mxu0 0.0
    %106 = vmatprep.subr.mxu0 0.0
    %107 = vmatpush2.msra.mxu0 0.0
    %108 = vmatprep.subr.mxu0 0.0
    %109 = vmatpush2.msra.mxu0 0.0
    %110 = vmatprep.subr.mxu0 0.0
    %111 = vmatpush2.msra.mxu0 0.0
    %112 = vmatprep.mubr.f32.mxu0 0.0
    %113 = vmatmul.mubr.f32.gmra.mxu0 %v43
    %v114 = vpop.f32.mrf.mxu0
    %v115 = vadd.f32 %v39, %v114
    %v116 = vpop.f32.mrf.mxu0
    %117 = vmatprep.mubr.f32.mxu0 0.0
    %118 = vmatmul.mubr.f32.gmra.mxu0 %v46
    %v119 = vpop.f32.mrf.mxu0
    %v120 = vadd.f32 %v39, %v119
    %v121 = vpop.f32.mrf.mxu0
    %122 = vdwg.mxu0
    %v123 = vmax.f32 %v115, 0.0
    %v124 = vmax.f32 %v120, 0.0
    %v125 = vld [vmem:[#allocation2] sm:$0xff]
    %v126 = vld [vmem:[#allocation2 + $0x8] sm:$0xff]
    %v127 = vld [vmem:[%s3] sm:$0xff]
    %v128 = vld [vmem:[%s3 + $0x8] sm:$0xff]
    %v129 = vld [vmem:[%s3 + $0x10] sm:$0xff]
    %v130 = vld [vmem:[%s3 + $0x18] sm:$0xff]
    %v131 = vld [vmem:[%s3 + $0x20] sm:$0xff]
    %v132 = vld [vmem:[%s3 + $0x28] sm:$0xff]
    %v133 = vld [vmem:[%s3 + $0x30] sm:$0xff]
    %v134 = vld [vmem:[%s3 + $0x38] sm:$0xff]
    %vm135 = vcmask 523264
    %v137 = vsel %vm135, %v123, 0
    %v140 = vsel %vm135, %v124, 0
    %142 = vmatprep.subr.mxu0 0.0
    %143 = vmatpush1.msra.mxu0 0.0
    %144 = vmatprep.subr.mxu0 0.0
    %145 = vmatpush1.msra.mxu0 0.0
    %146 = vmatprep.subr.mxu0 0.0
    %147 = vmatpush1.msra.mxu0 0.0
    %148 = vmatprep.subr.mxu0 0.0
    %149 = vmatpush1.msra.mxu0 0.0
    %150 = vmatprep.subr.mxu0 0.0
    %151 = vmatpush1.msra.mxu0 0.0
    %152 = vmatprep.subr.mxu0 0.0
    %153 = vmatpush1.msra.mxu0 0.0
    %154 = vmatprep.subr.mxu0 0.0
    %155 = vmatpush1.msra.mxu0 0.0
    %156 = vmatprep.subr.mxu0 0.0
    %157 = vmatpush1.msra.mxu0 0.0
    %158 = vmatprep.subr.mxu0 0.0
    %159 = vmatpush1.msra.mxu0 %v134
    %160 = vmatprep.subr.mxu0 0.0
    %161 = vmatpush1.msra.mxu0 %v133
    %162 = vmatprep.subr.mxu0 0.0
    %163 = vmatpush1.msra.mxu0 %v132
    %164 = vmatprep.subr.mxu0 0.0
    %165 = vmatpush1.msra.mxu0 %v131
    %166 = vmatprep.subr.mxu0 0.0
    %167 = vmatpush1.msra.mxu0 %v130
    %168 = vmatprep.subr.mxu0 0.0
    %169 = vmatpush1.msra.mxu0 %v129
    %170 = vmatprep.subr.mxu0 0.0
    %171 = vmatpush1.msra.mxu0 %v128
    %172 = vmatprep.subr.mxu0 0.0
    %173 = vmatpush1.msra.mxu0 %v127
    %174 = vmatprep.subr.mxu0 0.0
    %175 = vmatpush2.msra.mxu0 0.0
    %176 = vmatprep.subr.mxu0 0.0
    %177 = vmatpush2.msra.mxu0 0.0
    %178 = vmatprep.subr.mxu0 0.0
    %179 = vmatpush2.msra.mxu0 0.0
    %180 = vmatprep.subr.mxu0 0.0
    %181 = vmatpush2.msra.mxu0 0.0
    %182 = vmatprep.subr.mxu0 0.0
    %183 = vmatpush2.msra.mxu0 0.0
    %184 = vmatprep.subr.mxu0 0.0
    %185 = vmatpush2.msra.mxu0 0.0
    %186 = vmatprep.subr.mxu0 0.0
    %187 = vmatpush2.msra.mxu0 0.0
    %188 = vmatprep.subr.mxu0 0.0
    %189 = vmatpush2.msra.mxu0 0.0
    %190 = vmatprep.subr.mxu0 0.0
    %191 = vmatpush2.msra.mxu0 0.0
    %192 = vmatprep.subr.mxu0 0.0
    %193 = vmatpush2.msra.mxu0 0.0
    %194 = vmatprep.subr.mxu0 0.0
    %195 = vmatpush2.msra.mxu0 0.0
    %196 = vmatprep.subr.mxu0 0.0
    %197 = vmatpush2.msra.mxu0 0.0
    %198 = vmatprep.subr.mxu0 0.0
    %199 = vmatpush2.msra.mxu0 0.0
    %200 = vmatprep.subr.mxu0 0.0
    %201 = vmatpush2.msra.mxu0 0.0
    %202 = vmatprep.subr.mxu0 0.0
    %203 = vmatpush2.msra.mxu0 0.0
    %204 = vmatprep.subr.mxu0 0.0
    %205 = vmatpush2.msra.mxu0 0.0
    %206 = vmatprep.mubr.f32.mxu0 0.0
    %207 = vmatmul.mubr.f32.gmra.mxu0 %v137
    %v208 = vpop.f32.mrf.mxu0
    %v209 = vadd.f32 0.0, %v208
    %v210 = vpop.f32.mrf.mxu0
    %211 = vmatprep.mubr.f32.mxu0 0.0
    %212 = vmatmul.mubr.f32.gmra.mxu0 %v140
    %v213 = vpop.f32.mrf.mxu0
    %v214 = vadd.f32 0.0, %v213
    %v215 = vpop.f32.mrf.mxu0
    %216 = vdwg.mxu0
    %v217 = vadd.f32 %v125, %v209
    %v218 = vadd.f32 %v126, %v214
    %219 = vst.msk [vmem:[#allocation2] sm:$0xff] %vm41, %v217
    %220 = vst.msk [vmem:[#allocation2 + $0x8] sm:$0xff] %vm41, %v218
    // Predicated region
    $region26: #{feed_forward_network.1} parent=1 // pred_check
      %p221 = pneg %p21
    $region27: #{feed_forward_network.1} parent=1 // pred_check_branch
      %223 = sbr.rel (%p221) target = $region29
    $region28: #{feed_forward_network.1} parent=1 // pred_region
      %v224 = vld [vmem:[#allocation2] sm:$0xff]
      %v225 = vld [vmem:[#allocation2 + $0x8] sm:$0xff]
      %v226 = vld [vmem:[%s4] sm:$0x1]
      %v228 = vlaneseq
      %v229 = vshrl.u32 %v228, 7
      %v230 = vsub.s32 0, %v229
      %v231 = vrot.slane %v226, %v230
      %v233 = vadd.f32 %v224, %v231
      %v234 = vadd.f32 %v225, %v231
      %235 = vst.msk [vmem:[#allocation2] sm:$0xff] %vm41, %v233
      %236 = vst.msk [vmem:[#allocation2 + $0x8] sm:$0xff] %vm41, %v234
    $region29: #{feed_forward_network.1} parent=1 // pred_fallthru
      _
    // Predicated region
    $region30: #{feed_forward_network.1} parent=1 // pred_check
      _
    $region31: #{feed_forward_network.1} parent=1 // pred_check_branch
      %238 = sbr.rel (0) target = $region33
    $region32: #{feed_forward_network.1} parent=1 // pred_region
      %s240 = ssub.s32 256, 256
      %241 = vsyncadd [#allocation3], %s240
      %s242 = sshll.u32 [#allocation2], 4
      %s243 = int_to_ptr.vmem [resolvable:$true] %s242
      %248 = dma.vmem_to_hbm [thread:$0]  %s243, 256, %s5, [#allocation3], 128, 128, 8
    $region33: #{feed_forward_network.1} parent=1 // pred_fallthru
      _
    // Predicated region
    $region34: #{feed_forward_network.1} parent=1 // pred_check
      _
    $region35: #{feed_forward_network.1} parent=1 // pred_check_branch
      %250 = sbr.rel (0) target = $region37
    $region36: #{feed_forward_network.1} parent=1 // pred_region
      %251 = dma.done [#allocation3], 256
    $region37: #{feed_forward_network.1} parent=1 // pred_fallthru
      _
    %252 = vsyncpa [#allocation3], 1

</llo_original>
